<compile_context>
chip_gen: v5e
topology: v5e:2x2
jax: 0.10.0
libtpu: 0.0.40
codegen_flags: <defaults>
</compile_context>

<pallas_src>
import math

import jax
import jax.numpy as jnp
from jax import lax
from jax.experimental import pallas as pl
from jax.experimental.pallas import tpu as pltpu

_LANE = 128
# 8192x128 f32 block = 4 MiB per input per buffer; 2 inputs double-buffered
# (+ bool mask in the masked path) ~= 16-18 MiB.
_MAX_TILE_ROWS = 8192
# Raise v5e's 16 MiB scoped-VMEM default; within physical VMEM on all chips.
_VMEM_LIMIT_BYTES = 32 * 1024 * 1024
# Per-input byte budget for a block in the broadcast-mask (A, C, M) path.
_BCAST_BLOCK_BYTES = 1 << 20


# --------------------------------------------------------------------------
# Kernels (per-block partial sums -> scalar SMEM output slot per grid step)
# --------------------------------------------------------------------------
def _make_flat_kernel(tile_rows, total_rows, masked):
    """Sum of (p-g)^2 [ * v ] over a (tile_rows, 128) block -> scalar."""
    rem = total_rows % tile_rows  # valid rows in the (partial) last block

    def body(p_ref, g_ref, v_ref, out_ref):
        d = p_ref[...].astype(jnp.float32) - g_ref[...].astype(jnp.float32)
        sq = d * d
        if v_ref is not None:
            v = v_ref[...]
            if v.dtype == jnp.bool_:
                sq = jnp.where(v, sq, 0.0)
            else:
                sq = sq * v.astype(jnp.float32)
        if rem:
            i = pl.program_id(0)
            last = pl.num_programs(0) - 1

            @pl.when(i == last)
            def _():
                # Local row index (no i*tile offset -> no int32 overflow risk).
                row = lax.broadcasted_iota(jnp.int32, sq.shape, 0)
                out_ref[0, 0] = jnp.sum(jnp.where(row < rem, sq, 0.0))

            @pl.when(i != last)
            def _():
                out_ref[0, 0] = jnp.sum(sq)
        else:
            out_ref[0, 0] = jnp.sum(sq)

    if masked:
        def kernel(p_ref, g_ref, v_ref, out_ref):
            body(p_ref, g_ref, v_ref, out_ref)
    else:
        def kernel(p_ref, g_ref, out_ref):
            body(p_ref, g_ref, None, out_ref)
    return kernel


def _make_bcast_kernel(tile_cols, total_cols):
    """Sum of (p-g)^2 * v over a (1, C, tile_cols) block; mask is (1,1,tile)."""
    rem = total_cols % tile_cols

    def kernel(p_ref, g_ref, v_ref, out_ref):
        d = p_ref[...].astype(jnp.float32) - g_ref[...].astype(jnp.float32)
        sq = d * d                       # (1, C, t)
        v = v_ref[...]                   # (1, 1, t) -> broadcast over C in-register
        if v.dtype == jnp.bool_:
            sq = jnp.where(v, sq, 0.0)
        else:
            sq = sq * v.astype(jnp.float32)
        if rem:
            j = pl.program_id(1)
            last = pl.num_programs(1) - 1

            @pl.when(j == last)
            def _():
                col = lax.broadcasted_iota(jnp.int32, sq.shape, 2)
                out_ref[0, 0] = jnp.sum(jnp.where(col < rem, sq, 0.0))

            @pl.when(j != last)
            def _():
                out_ref[0, 0] = jnp.sum(sq)
        else:
            out_ref[0, 0] = jnp.sum(sq)

    return kernel


# --------------------------------------------------------------------------
# pallas_call wrappers
# --------------------------------------------------------------------------
def _flat_lanes(x):
    """Flatten (original dtype) into a lane-dense (rows, 128) view.

    Only pads (one extra copy) when numel % 128 != 0; the common lane-aligned
    case is a free reshape."""
    flat = x.reshape(-1)
    n = flat.shape[0]
    rows = -(-n // _LANE)
    pad = rows * _LANE - n
    if pad:
        flat = jnp.pad(flat, (0, pad))  # zeros / False contribute 0
    return flat.reshape(rows, _LANE), rows


def _sum_flat(arrays, rows, masked, max_tile_rows):
    tile = min(rows, max_tile_rows)
    n_blocks = -(-rows // tile)
    out = pl.pallas_call(
        _make_flat_kernel(tile, rows, masked),
        out_shape=jax.ShapeDtypeStruct((1, n_blocks), jnp.float32),
        grid=(n_blocks,),
        in_specs=[pl.BlockSpec((tile, _LANE), lambda i: (i, 0)) for _ in arrays],
        out_specs=pl.BlockSpec((1, 1), lambda i: (0, i),
                               memory_space=pltpu.SMEM),
        compiler_params=pltpu.CompilerParams(
            dimension_semantics=("parallel",),
            vmem_limit_bytes=_VMEM_LIMIT_BYTES),
    )(*arrays)
    return jnp.sum(out)


def _sum_bcast(pred, gt, valid, a, c, m, block_bytes):
    """Numerator for a mask that broadcasts over a contiguous dim block C."""
    p3 = pred.reshape(a, c, m)
    g3 = gt.reshape(a, c, m)
    v3 = valid.reshape(a, 1, m)
    m_pad = -(-m // _LANE) * _LANE
    if m_pad != m:
        padw = ((0, 0), (0, 0), (0, m_pad - m))
        p3 = jnp.pad(p3, padw)
        g3 = jnp.pad(g3, padw)
        v3 = jnp.pad(v3, padw)  # False / 0 contributes nothing

    itemsize = pred.dtype.itemsize
    tm = max(_LANE, (block_bytes // (itemsize * c)) // _LANE * _LANE)
    tm = min(tm, m_pad)
    n_j = -(-m_pad // tm)

    out = pl.pallas_call(
        _make_bcast_kernel(tm, m_pad),
        out_shape=jax.ShapeDtypeStruct((1, a * n_j), jnp.float32),
        grid=(a, n_j),
        in_specs=[
            pl.BlockSpec((1, c, tm), lambda i, j: (i, 0, j)),
            pl.BlockSpec((1, c, tm), lambda i, j: (i, 0, j)),
            pl.BlockSpec((1, 1, tm), lambda i, j: (i, 0, j)),
        ],
        out_specs=pl.BlockSpec((1, 1), lambda i, j: (0, i * n_j + j),
                               memory_space=pltpu.SMEM),
        compiler_params=pltpu.CompilerParams(
            dimension_semantics=("parallel", "parallel"),
            vmem_limit_bytes=_VMEM_LIMIT_BYTES),
    )(p3, g3, v3)
    return jnp.sum(out)


def _split_broadcast(pred_shape, valid_shape):
    """Return (a, c, m) if valid broadcasts over one contiguous block of pred
    dims, None for the same-shape case, or "fallback"."""
    if len(valid_shape) > len(pred_shape):
        return "fallback"
    v = (1,) * (len(pred_shape) - len(valid_shape)) + tuple(valid_shape)
    if any(q != 1 and q != p for p, q in zip(pred_shape, v)):
        raise ValueError("valid is not broadcast-compatible with pred")
    bdims = [i for i, (p, q) in enumerate(zip(pred_shape, v)) if q == 1 and p != 1]
    if not bdims:
        return None  # effectively same shape
    if bdims != list(range(bdims[0], bdims[-1] + 1)):
        return "fallback"  # non-contiguous broadcast pattern
    a = int(math.prod(pred_shape[:bdims[0]]))
    c = int(math.prod(pred_shape[bdims[0]:bdims[-1] + 1]))
    m = int(math.prod(pred_shape[bdims[-1] + 1:]))
    if m < _LANE:  # padding m up to a lane would inflate traffic; fall back
        return "fallback"
    return (a, c, m)


# --------------------------------------------------------------------------
# Public entry point — matches L2.forward(pred, gt, valid)
# --------------------------------------------------------------------------
def l2_loss(pred, gt, valid=None, boundary_ignore=None,
            _max_tile_rows=_MAX_TILE_ROWS, _bcast_block_bytes=_BCAST_BLOCK_BYTES):
    if boundary_ignore is not None:
        b = boundary_ignore
        pred = pred[..., b:-b, b:-b]
        gt = gt[..., b:-b, b:-b]
        if valid is not None:
            valid = valid[..., b:-b, b:-b]

    n_elem = pred.size  # static

    if valid is None:
        p2, rows = _flat_lanes(pred)
        g2, _ = _flat_lanes(gt)
        sumsq = _sum_flat((p2, g2), rows, masked=False,
                          max_tile_rows=_max_tile_rows)
        # F.mse_loss default reduction='mean'
        return sumsq / jnp.float32(n_elem)

    # Masked path: kernels compute only the numerator sum(sq * valid_bcast);
    # the denominator valid.sum() * elem_ratio + eps is a reduction over the
    # small, un-broadcast mask done in plain JAX.
    elem_ratio = n_elem / valid.size
    den = jnp.sum(valid.astype(jnp.float32)) * jnp.float32(elem_ratio)

    split = _split_broadcast(pred.shape, valid.shape)
    if isinstance(split, tuple):
        a, c, m = split
        num = _sum_bcast(pred, gt, valid, a, c, m, _bcast_block_bytes)
    else:
        if split == "fallback":
            # TODO(synk): rare non-contiguous / tiny-minor broadcast pattern;
            # materialize the mask instead of giving it its own BlockSpec.
            valid_s = jnp.broadcast_to(valid, pred.shape)
        else:
            valid_s = valid  # same shape: stream the mask in its original dtype
        p2, rows = _flat_lanes(pred)
        g2, _ = _flat_lanes(gt)
        v2, _ = _flat_lanes(valid_s)
        num = _sum_flat((p2, g2, v2), rows, masked=True,
                        max_tile_rows=_max_tile_rows)

    return num / (den + jnp.float32(1e-12))


if __name__ == "__main__":
    key = jax.random.PRNGKey(0)
    ks = jax.random.split(key, 8)

    # --- small shapes ---
    pred = jax.random.normal(ks[0], (2, 4, 16, 16), dtype=jnp.float32)
    gt = jax.random.normal(ks[1], (2, 4, 16, 16), dtype=jnp.float32)
    valid_b = jax.random.uniform(ks[2], (2, 1, 16, 16)) > 0.3   # broadcasts over C
    valid_f = jax.random.uniform(ks[3], (2, 4, 16, 16)) > 0.5   # same shape

    # 1) plain MSE (valid=None)
    out = jax.block_until_ready(l2_loss(pred, gt))
    ref = jnp.mean((pred - gt) ** 2)
    assert jnp.allclose(out, ref, rtol=1e-5, atol=1e-6), (out, ref)

    # 2) broadcast mask (B,1,H,W) — un-materialized mask path
    out = jax.block_until_ready(l2_loss(pred, gt, valid=valid_b))
    vb = jnp.broadcast_to(valid_b.astype(jnp.float32), pred.shape)
    ref = jnp.sum((pred - gt) ** 2 * vb) / (jnp.sum(vb) + 1e-12)
    assert jnp.allclose(out, ref, rtol=1e-5, atol=1e-6), (out, ref)

    # 3) same-shape mask — flat masked kernel
    out = jax.block_until_ready(l2_loss(pred, gt, valid=valid_f))
    vf = valid_f.astype(jnp.float32)
    ref = jnp.sum((pred - gt) ** 2 * vf) / (jnp.sum(vf) + 1e-12)
    assert jnp.allclose(out, ref, rtol=1e-5, atol=1e-6), (out, ref)

    # 4) boundary_ignore path (rows = 9, full-array block)
    out = jax.block_until_ready(l2_loss(pred, gt, boundary_ignore=2))
    ref = jnp.mean((pred[..., 2:-2, 2:-2] - gt[..., 2:-2, 2:-2]) ** 2)
    assert jnp.allclose(out, ref, rtol=1e-5, atol=1e-6), (out, ref)

    # --- moderate shapes: exercise multi-block grids + tail masks with small
    #     tile overrides so the test data stays small ---
    pred2 = jax.random.normal(ks[4], (2, 4, 132, 132), dtype=jnp.float32)
    gt2 = jax.random.normal(ks[5], (2, 4, 132, 132), dtype=jnp.float32)
    valid2 = jax.random.uniform(ks[6], (2, 1, 132, 132)) > 0.3

    # 5) multi-block flat grid with partial last block (rows=1089, tile=256)
    out = jax.block_until_ready(l2_loss(pred2, gt2, _max_tile_rows=256))
    ref = jnp.mean((pred2 - gt2) ** 2)
    assert jnp.allclose(out, ref, rtol=1e-4, atol=1e-6), (out, ref)

    # 6) broadcast mask with multi-block lane grid + tail col-mask
    out = jax.block_until_ready(
        l2_loss(pred2, gt2, valid=valid2, _bcast_block_bytes=32 * 1024))
    vb2 = jnp.broadcast_to(valid2.astype(jnp.float32), pred2.shape)
    ref = jnp.sum((pred2 - gt2) ** 2 * vb2) / (jnp.sum(vb2) + 1e-12)
    assert jnp.allclose(out, ref, rtol=1e-4, atol=1e-6), (out, ref)

    print("KERNEL_OK")
</pallas_src>

<mosaic_0001>
module attributes {stable_mosaic.version = 11 : i64} {
  func.func @kernel(%arg0: i32, %arg1: memref<16x128xf32, #tpu.memory_space<vmem>>, %arg2: memref<16x128xf32, #tpu.memory_space<vmem>>, %arg3: memref<1x1xf32, #tpu.memory_space<smem>>) attributes {dimension_semantics = [#tpu.dimension_semantics<parallel>], iteration_bounds = array<i64: 1>, scalar_prefetch = 0 : i64, scratch_operands = 0 : i64, tpu.core_type = #tpu.core_type<tc>, window_params = [{transform_indices = @transform_0, window_bounds = array<i64: 16, 128>}, {transform_indices = @transform_1, window_bounds = array<i64: 16, 128>}, {transform_indices = @transform_2, window_bounds = array<i64: 1, 1>}]} {
    %c0 = arith.constant 0 : index
    %c0_0 = arith.constant 0 : index
    %0 = vector.load %arg1[%c0, %c0_0] : memref<16x128xf32, #tpu.memory_space<vmem>>, vector<16x128xf32>
    %c0_1 = arith.constant 0 : index
    %c0_2 = arith.constant 0 : index
    %1 = vector.load %arg2[%c0_1, %c0_2] : memref<16x128xf32, #tpu.memory_space<vmem>>, vector<16x128xf32>
    %2 = arith.subf %0, %1 : vector<16x128xf32>
    %3 = arith.mulf %2, %2 : vector<16x128xf32>
    %4 = vector.shape_cast %3 : vector<16x128xf32> to vector<1x16x128xf32>
    %cst = arith.constant dense<0.000000e+00> : vector<1xf32>
    %5 = vector.multi_reduction <add>, %4, %cst [1, 2] : vector<1x16x128xf32> to vector<1xf32>
    %6 = vector.shape_cast %5 : vector<1xf32> to vector<1x1x1xf32>
    %7 = vector.extract %6[0, 0, 0] : f32 from vector<1x1x1xf32>
    %c0_3 = arith.constant 0 : index
    %c0_4 = arith.constant 0 : index
    %8 = memref.load %arg3[%c0_3, %c0_4] : memref<1x1xf32, #tpu.memory_space<smem>>
    memref.store %7, %arg3[%c0_3, %c0_4] : memref<1x1xf32, #tpu.memory_space<smem>>
    return
  }
  func.func @transform_0(%arg0: i32) -> (i32, i32) {
    %c0_i32 = arith.constant 0 : i32
    %c0_i32_0 = arith.constant 0 : i32
    return %arg0, %c0_i32 : i32, i32
  }
  func.func @transform_1(%arg0: i32) -> (i32, i32) {
    %c0_i32 = arith.constant 0 : i32
    %c0_i32_0 = arith.constant 0 : i32
    return %arg0, %c0_i32 : i32, i32
  }
  func.func @transform_2(%arg0: i32) -> (i32, i32) {
    %c0_i32 = arith.constant 0 : i32
    %c0_i32_0 = arith.constant 0 : i32
    return %c0_i32, %arg0 : i32, i32
  }
}

</mosaic_0001>

<llo_original>
// kernel: tpu_custom_call.1
$region0: #{tpu_custom_call.1}
  #allocation0 [shape = 'u32[]', space=smem, size = 0x4, offset = 0x4, fixed_abs, tag = 'smem constant byte address 0x4 - core index']
  #allocation1 [shape = 'u32[72,128]{1,0:T(1,128)}', space=vmem, size = 0x9000, scoped, tag = 'internal scratch']
  %s0 = inlined_call_operand.hbm [shape: f32[16,128], index: 0, kind: input, shape index: {}]
  %s1 = inlined_call_operand.hbm [shape: f32[16,128], index: 1, kind: input, shape index: {}]
  %s2 = inlined_call_operand.hbm [shape: f32[1,1], index: 2, kind: output, shape index: {}]
  %s3 = sld [smem:[#allocation0]]
  $region26: #{tpu_custom_call.1} parent=0
    _
  %s5 = ssub.s32 1, %s3
  %s6 = scalar_select 0, %s5, %s3
  $region1: #{tpu_custom_call.1} parent=0
    #allocation2 [shape = 'u8[8192]{0}', space=vmem, size = 0x2000, scoped, tag = 'input window, operand 0, single buffered']
    #allocation3 [shape = 's32[1]{0}', space=sflag, size = 0x4, scoped, tag = 'scoped memory for tpu_custom_call.1']
    #allocation4 [shape = 's32[1]{0}', space=sflag, size = 0x4, scoped, tag = 'scoped memory for tpu_custom_call.1']
    #allocation5 [shape = 'u8[8192]{0}', space=vmem, size = 0x2000, scoped, tag = 'input window, operand 1, single buffered']
    #allocation6 [shape = 's32[1]{0}', space=sflag, size = 0x4, scoped, tag = 'scoped memory for tpu_custom_call.1']
    #allocation7 [shape = 'u8[512]{0}', space=smem, size = 0x200, scoped, tag = 'output window, operand 0, single buffered']
    %7 = vsyncpa [#allocation3], 0
    %8 = vsyncpa [#allocation6], 0
    %9 = vsyncpa [#allocation4], 0
    // Predicated region
    $region2: #{tpu_custom_call.1} parent=1 // pred_check
      _
    $region3: #{tpu_custom_call.1} parent=1 // pred_check_branch
      %11 = sbr.rel (0) target = $region5
    $region4: #{tpu_custom_call.1} parent=1 // pred_region
      %13 = vsyncadd [#allocation3], 0
      %s14 = sshll.u32 %s0, 4
      %s15 = int_to_ptr.hbm [resolvable:$true] %s14
      %s16 = sshll.u32 [#allocation2], 4
      %s17 = int_to_ptr.vmem [resolvable:$true] %s16
      %22 = dma.hbm_to_vmem [thread:$0]  %s15, 256, %s17, [#allocation3], 128, 128, 8
    $region5: #{tpu_custom_call.1} parent=1 // pred_fallthru
      _
    // Predicated region
    $region6: #{tpu_custom_call.1} parent=1 // pred_check
      _
    $region7: #{tpu_custom_call.1} parent=1 // pred_check_branch
      %24 = sbr.rel (0) target = $region9
    $region8: #{tpu_custom_call.1} parent=1 // pred_region
      %26 = vsyncadd [#allocation6], 0
      %s27 = sshll.u32 %s1, 4
      %s28 = int_to_ptr.hbm [resolvable:$true] %s27
      %s29 = sshll.u32 [#allocation5], 4
      %s30 = int_to_ptr.vmem [resolvable:$true] %s29
      %35 = dma.hbm_to_vmem [thread:$0]  %s28, 256, %s30, [#allocation6], 128, 128, 8
    $region9: #{tpu_custom_call.1} parent=1 // pred_fallthru
      _
    // Predicated region
    $region10: #{tpu_custom_call.1} parent=1 // pred_check
      _
    $region11: #{tpu_custom_call.1} parent=1 // pred_check_branch
      %37 = sbr.rel (0) target = $region13
    $region12: #{tpu_custom_call.1} parent=1 // pred_region
      %39 = dma.done [#allocation3], 256
    $region13: #{tpu_custom_call.1} parent=1 // pred_fallthru
      _
    // Predicated region
    $region14: #{tpu_custom_call.1} parent=1 // pred_check
      _
    $region15: #{tpu_custom_call.1} parent=1 // pred_check_branch
      %41 = sbr.rel (0) target = $region17
    $region16: #{tpu_custom_call.1} parent=1 // pred_region
      %43 = dma.done [#allocation6], 256
    $region17: #{tpu_custom_call.1} parent=1 // pred_fallthru
      _
    %v44 = vld [vmem:[#allocation2] sm:$0xff]
    %v45 = vld [vmem:[#allocation2 + $0x8] sm:$0xff]
    %v46 = vld [vmem:[#allocation5] sm:$0xff]
    %v47 = vld [vmem:[#allocation5 + $0x8] sm:$0xff]
    %v48 = vsub.f32 %v44, %v46
    %v49 = vsub.f32 %v45, %v47
    %v50 = vmul.f32 %v48, %v48
    %v51 = vmul.f32 %v49, %v49
    %v52 = vadd.f32 %v50, %v51
    %53 = vadd.xlane.f32.xlu0 %v52
    %v54 = vpop.xlane.xlu0 %53
    %v55 = vrot.slane %v54, 4
    %v56 = vadd.f32 %v54, %v55
    %v57 = vrot.slane %v56, 2
    %v58 = vadd.f32 %v56, %v57
    %v59 = vrot.slane %v58, 1
    %v60 = vadd.f32 %v58, %v59
    %s61 = vtos %v60
    %s62 = scalar_lea.smem [#allocation7], 0
    %63 = sst [smem:[%s62]] %s61
    // Predicated region
    $region18: #{tpu_custom_call.1} parent=1 // pred_check
      _
    $region19: #{tpu_custom_call.1} parent=1 // pred_check_branch
      %65 = sbr.rel (0) target = $region21
    $region20: #{tpu_custom_call.1} parent=1 // pred_region
      %67 = vsyncadd [#allocation4], 0
      %s69 = sshll.u32 %s2, 4
      %s70 = int_to_ptr.hbm [resolvable:$true] %s69
      %72 = dma.smem_to_hbm [#allocation7], 16, %s70, [#allocation4]
    $region21: #{tpu_custom_call.1} parent=1 // pred_fallthru
      _
    // Predicated region
    $region22: #{tpu_custom_call.1} parent=1 // pred_check
      _
    $region23: #{tpu_custom_call.1} parent=1 // pred_check_branch
      %74 = sbr.rel (0) target = $region25
    $region24: #{tpu_custom_call.1} parent=1 // pred_region
      %76 = dma.done [#allocation4], 16
    $region25: #{tpu_custom_call.1} parent=1 // pred_fallthru
      _
    %77 = sfence
    %78 = vsyncpa [#allocation3], 1
    %79 = vsyncpa [#allocation6], 1
    %80 = vsyncpa [#allocation4], 1

</llo_original>
